<compile_context>
chip_gen: v7x
topology: tpu7x:2x2x1
jax: 0.10.0
libtpu: 0.0.40
codegen_flags: <defaults>
</compile_context>

<pallas_src>
import functools

import jax
import jax.numpy as jnp
from jax import lax
from jax.experimental import pallas as pl
from jax.experimental.pallas import tpu as pltpu

MARGIN = 0.2
EPS = 1e-12            # F.normalize default eps
INV_EPS = 1.0 / EPS    # clamp for rsqrt (1/max(n,eps) == min(1/n, 1/eps))
NEG_BIG = -1e30        # additive bias that zeroes hinge terms of padded rows/cols


def _round_up(x, m):
    return ((x + m - 1) // m) * m


def _vmem_budget_bytes():
    """Per-core VMEM budget used for tile sizing and vmem_limit_bytes."""
    cap = 64 * 1024 * 1024                      # conservative default (v7x per-TC)
    try:
        cap = int(pltpu.get_tpu_info().vmem_capacity_bytes)
    except Exception:
        pass
    # Leave headroom for compiler temporaries / semaphores / un-modeled buffers.
    return max(16 * 1024 * 1024, min(int(cap * 0.7), 96 * 1024 * 1024))


def _default_tile_j():
    """Streamed (column) tile: lane-dense 256; 128 on v5e (128x128 MXU, small VMEM)."""
    try:
        kind = jax.devices()[0].device_kind.lower()
    except Exception:
        kind = ""
    return 128 if ("v5 lite" in kind or "v5e" in kind) else 256


def _pick_row_tile(total, fits):
    """Largest divisor t of `total` with (t % 8 == 0 or t == total) and fits(t)."""
    divs = set()
    n = 1
    while n * n <= total:
        if total % n == 0:
            divs.add(n)
            divs.add(total // n)
        n += 1
    cands = sorted((t for t in divs if t % 8 == 0 or t == total), reverse=True)
    for t in cands:
        if fits(t):
            return t
    return cands[-1]    # best effort: smallest legal tile


# ---------------------------------------------------------------------------
# Stage 1: tiny per-row statistics only (no normalized copies written to HBM):
#   inv_i[r] = 1 / max(||img[r]||, eps)
#   inv_t[r] = 1 / max(||txt[r]||, eps)
#   pos[r]   = <img[r], txt[r]> * inv_i[r] * inv_t[r]   (== <img_n[r], txt_n[r]>)
# ---------------------------------------------------------------------------
def _row_stats_kernel(img_ref, txt_ref, inv_i_ref, inv_t_ref, pos_ref):
    img = img_ref[...].astype(jnp.float32)   # (T, D)
    txt = txt_ref[...].astype(jnp.float32)   # (T, D)

    # F.normalize(x, dim=1) scale == min(rsqrt(||x||^2), 1/eps)  (EUP rsqrt;
    # the clamp also keeps padded all-zero rows finite: min(inf, 1e12)).
    inv_i = jnp.minimum(lax.rsqrt(jnp.sum(img * img, axis=1, keepdims=True)),
                        jnp.float32(INV_EPS))
    inv_t = jnp.minimum(lax.rsqrt(jnp.sum(txt * txt, axis=1, keepdims=True)),
                        jnp.float32(INV_EPS))

    inv_i_ref[...] = inv_i                                            # (T, 1)
    inv_t_ref[...] = inv_t                                            # (T, 1)
    pos_ref[...] = jnp.sum(img * txt, axis=1, keepdims=True) * inv_i * inv_t


# ---------------------------------------------------------------------------
# Stage 2: tiled (i, j) sweep over the BxB similarity space.
#   raw = img_raw_tile @ txt_raw_tile.T   (MXU, contraction on dim 1 of both)
#   sim = raw * inv_row * inv_col  [+ bias_row + bias_col  when padded]
#   acc += relu(sim - pos_row + m) + relu(sim - pos_col + m)    (elementwise)
#   finalize (j == last): reduce acc once, write per-row-tile partial sum.
# ---------------------------------------------------------------------------
def _hinge_tile_kernel(*refs, margin, padded):
    if padded:
        (img_ref, txt_ref, inv_r_ref, inv_c_ref, pos_r_ref, pos_c_ref,
         bias_r_ref, bias_c_ref, out_ref, acc_ref) = refs
    else:
        (img_ref, txt_ref, inv_r_ref, inv_c_ref, pos_r_ref, pos_c_ref,
         out_ref, acc_ref) = refs
        bias_r_ref = bias_c_ref = None

    j = pl.program_id(1)

    @pl.when(j == 0)
    def _init():
        acc_ref[...] = jnp.zeros_like(acc_ref)

    # (tile_i, tile_j) raw similarity; contraction on dim 1 of both operands so
    # the streamed RHS is consumed without materializing a transpose.
    raw = lax.dot_general(
        img_ref[...], txt_ref[...],
        dimension_numbers=(((1,), (1,)), ((), ())),
        preferred_element_type=jnp.float32)

    # Post-matmul normalization: two broadcast multiplies in f32.
    sim = raw * inv_r_ref[...] * inv_c_ref[...]
    if padded:
        # -1e30 bias on padded rows/cols drives both hinge terms to exactly 0.
        sim = sim + bias_r_ref[...] + bias_c_ref[...]

    # No diagonal mask: diagonal entries contribute ~relu(margin) to each of
    # the two terms; subtracted analytically in the wrapper.
    acc_ref[...] += (jnp.maximum(sim - pos_r_ref[...] + margin, 0.0) +
                     jnp.maximum(sim - pos_c_ref[...] + margin, 0.0))

    @pl.when(j == pl.num_programs(1) - 1)
    def _finalize():
        part = jnp.sum(acc_ref[...], axis=1, keepdims=True)   # lanes   -> (tile_i, 1)
        part = jnp.sum(part, axis=0, keepdims=True)           # sublane -> (1, 1)
        out_ref[...] = jnp.broadcast_to(part, out_ref.shape)  # (8, 128) partial block


def hinge_triplet_ranking_loss(image_embeds, text_embeds, margin=MARGIN,
                               mining_negatives="max",
                               tile_i=None, tile_j=None,
                               use_bf16_matmul=None):
    # `mining_negatives` validated for interface parity only; its result is
    # discarded by the reference module, so it never affects the loss.
    if mining_negatives not in ("max", "sum"):
        raise ValueError("mining_negatives must be either sum or max")

    B, D = image_embeds.shape
    assert text_embeds.shape == (B, D)
    if B < 2:
        raise ValueError("batch size must be >= 2 (B*(B-1) denominator)")

    budget = _vmem_budget_bytes()
    in_bytes = jnp.dtype(image_embeds.dtype).itemsize

    # ---- streamed (column) tile and padded batch ---------------------------
    if tile_j is None:
        if B <= 256:
            tile_j = _round_up(B, 8)          # single j tile (block == full dim)
        elif B <= 1024:
            tile_j = 128                      # limit padding waste at small B
        else:
            tile_j = _default_tile_j()
    b_pad = _round_up(B, tile_j)
    assert tile_j % 8 == 0 or tile_j == b_pad
    assert tile_j % 128 == 0 or tile_j == b_pad   # (1, tile_j) lane constraint
    n_j = b_pad // tile_j
    padded = b_pad != B

    if padded:
        pad = ((0, b_pad - B), (0, 0))
        image_embeds = jnp.pad(image_embeds, pad)
        text_embeds = jnp.pad(text_embeds, pad)

    # ---- MXU operand dtype (accuracy knob) ----------------------------------
    # Default: keep the input dtype (exact parity for f32 inputs).  Setting
    # use_bf16_matmul=True casts the raw operands to bf16 for the dominant
    # matmul (full MXU rate, half the streamed bytes, ~1e-3 relative error);
    # stage 1, the rescale, hinge math and accumulation stay f32.
    if use_bf16_matmul is None:
        use_bf16 = image_embeds.dtype == jnp.bfloat16
    else:
        use_bf16 = bool(use_bf16_matmul)
    if use_bf16 and image_embeds.dtype != jnp.bfloat16:
        img_mxu = image_embeds.astype(jnp.bfloat16)
        txt_mxu = text_embeds.astype(jnp.bfloat16)
    else:
        img_mxu, txt_mxu = image_embeds, text_embeds
    op_bytes = jnp.dtype(img_mxu.dtype).itemsize

    # ---- Stage 1: per-row stats (tiny outputs, megacore-parallel) -----------
    def _fits_stage1(t):
        blocks = 2 * 2 * t * D * in_bytes     # img+txt blocks, double-buffered
        temps = 6 * t * D * 4                 # f32 casts / squares / products
        return blocks + temps <= 0.8 * budget

    tile_r = _pick_row_tile(b_pad, _fits_stage1)

    inv_i, inv_t, pos = pl.pallas_call(
        _row_stats_kernel,
        out_shape=(jax.ShapeDtypeStruct((b_pad, 1), jnp.float32),
                   jax.ShapeDtypeStruct((b_pad, 1), jnp.float32),
                   jax.ShapeDtypeStruct((b_pad, 1), jnp.float32)),
        grid_spec=pltpu.PrefetchScalarGridSpec(
            num_scalar_prefetch=0,
            grid=(b_pad // tile_r,),
            in_specs=[pl.BlockSpec((tile_r, D), lambda r: (r, 0)),
                      pl.BlockSpec((tile_r, D), lambda r: (r, 0))],
            out_specs=[pl.BlockSpec((tile_r, 1), lambda r: (r, 0)),
                       pl.BlockSpec((tile_r, 1), lambda r: (r, 0)),
                       pl.BlockSpec((tile_r, 1), lambda r: (r, 0))],
        ),
        compiler_params=pltpu.CompilerParams(
            dimension_semantics=("parallel",),
            vmem_limit_bytes=budget),
    )(image_embeds, text_embeds)

    # Both orientations come from the SAME stage-1 values (tiny XLA reshape),
    # so the row and column hinge terms use bit-identical positives.
    inv_r = inv_i                        # (b_pad, 1)  1/||img_i||
    inv_c = inv_t.reshape(1, b_pad)      # (1, b_pad)  1/||txt_j||
    pos_r = pos                          # (b_pad, 1)
    pos_c = pos.reshape(1, b_pad)        # (1, b_pad)

    # ---- Stage 2: tile selection (asymmetric; row block resident over j) ----
    if tile_i is None:
        def _fits_stage2(ti):
            blocks = 2 * ti * D * op_bytes + 2 * tile_j * D * op_bytes
            vecs = 2 * 4 * 4 * (ti + tile_j)          # inv/pos/bias blocks
            acc = ti * tile_j * 4                     # resident accumulator
            temps = 8 * ti * tile_j * 4               # sim + hinge temporaries
            return blocks + vecs + acc + temps <= 0.8 * budget
        tile_i = _pick_row_tile(b_pad, _fits_stage2)
    else:
        assert b_pad % tile_i == 0 and (tile_i % 8 == 0 or tile_i == b_pad), \
            (tile_i, b_pad)
    n_i = b_pad // tile_i

    inputs = [img_mxu, txt_mxu, inv_r, inv_c, pos_r, pos_c]
    in_specs = [
        pl.BlockSpec((tile_i, D), lambda i, j: (i, 0)),   # img rows: resident over j
        pl.BlockSpec((tile_j, D), lambda i, j: (j, 0)),   # txt rows: streamed
        pl.BlockSpec((tile_i, 1), lambda i, j: (i, 0)),   # inv norm (rows)
        pl.BlockSpec((1, tile_j), lambda i, j: (0, j)),   # inv norm (cols)
        pl.BlockSpec((tile_i, 1), lambda i, j: (i, 0)),   # pos (rows)
        pl.BlockSpec((1, tile_j), lambda i, j: (0, j)),   # pos (cols)
    ]
    if padded:
        # Validity bias computed ONCE here (not per grid step): 0 for real
        # rows/cols, -1e30 for padded ones -> both hinge terms relu to 0.
        bias = jnp.where(jnp.arange(b_pad) < B, 0.0, NEG_BIG).astype(jnp.float32)
        inputs += [bias.reshape(b_pad, 1), bias.reshape(1, b_pad)]
        in_specs += [pl.BlockSpec((tile_i, 1), lambda i, j: (i, 0)),
                     pl.BlockSpec((1, tile_j), lambda i, j: (0, j))]

    kernel = functools.partial(_hinge_tile_kernel,
                               margin=float(margin), padded=padded)

    flops = 2 * b_pad * b_pad * D
    bytes_accessed = ((n_i + 1) * b_pad * D * op_bytes   # txt streamed n_i x + img once
                      + 6 * b_pad * 4                    # per-row vectors
                      + 8 * n_i * 128 * 4)               # partial-sum output

    partials = pl.pallas_call(
        kernel,
        # One (8,128) block of partial sums per row tile -> i axis can be
        # megacore-"parallel" (v7x); trivial XLA reduce outside.
        out_shape=jax.ShapeDtypeStruct((8 * n_i, 128), jnp.float32),
        grid_spec=pltpu.PrefetchScalarGridSpec(
            num_scalar_prefetch=0,
            grid=(n_i, n_j),                 # j innermost: row block not re-DMA'd
            in_specs=in_specs,
            out_specs=pl.BlockSpec((8, 128), lambda i, j: (i, 0)),
            scratch_shapes=[pltpu.VMEM((tile_i, tile_j), jnp.float32)],
        ),
        compiler_params=pltpu.CompilerParams(
            dimension_semantics=("parallel", "arbitrary"),
            vmem_limit_bytes=budget),
        cost_estimate=pl.CostEstimate(flops=flops, transcendentals=0,
                                      bytes_accessed=bytes_accessed),
    )(*inputs)
    # TODO(synk): sweep pipeline_mode=pl.Buffered(3) on the streamed txt
    # BlockSpec for very small D (DMA-exposed regime).

    total = jnp.sum(partials[::8, 0])                       # n_i partials
    # Analytic diagonal correction: each valid diagonal entry contributed
    # ~relu(margin) to both hinge terms (exact up to MXU-vs-VPU rounding of
    # diag(sim) vs pos; error O(delta/(B-1)), negligible for |margin| >> delta).
    correction = 2.0 * B * max(float(margin), 0.0)
    return (total - correction) / float(B * (B - 1))


def _reference_loss(image_embeds, text_embeds, margin=MARGIN):
    """Plain-JAX reference mirroring the PyTorch module exactly."""
    img = image_embeds.astype(jnp.float32)
    txt = text_embeds.astype(jnp.float32)
    img_n = img / jnp.maximum(jnp.linalg.norm(img, axis=1, keepdims=True), EPS)
    txt_n = txt / jnp.maximum(jnp.linalg.norm(txt, axis=1, keepdims=True), EPS)
    sim = jnp.matmul(img_n, txt_n.T, precision=lax.Precision.HIGHEST)
    B = sim.shape[0]
    pos = jnp.diag(sim)
    mask = ~jnp.eye(B, dtype=bool)

    def one_term(S):
        neg = S[mask].reshape(B, B - 1)            # off-diagonal, row-major
        return jax.nn.relu(neg.T - pos + margin)   # (B-1, B)

    return jnp.mean(one_term(sim) + one_term(sim.T))


if __name__ == "__main__":
    key = jax.random.PRNGKey(0)

    def check(B, D, seed=0, rtol=1e-4, atol=1e-5, **kw):
        k1, k2 = jax.random.split(jax.random.fold_in(key, seed))
        img = jax.random.normal(k1, (B, D), dtype=jnp.float32)
        txt = jax.random.normal(k2, (B, D), dtype=jnp.float32)
        loss = jax.block_until_ready(hinge_triplet_ranking_loss(img, txt, **kw))
        ref = _reference_loss(img, txt)
        assert jnp.allclose(loss, ref, rtol=rtol, atol=atol), (B, D, kw, loss, ref)

    check(8, 32)                                      # single tile, no padding
    check(12, 32, seed=1)                             # padded batch (bias path)
    check(320, 32, seed=2, tile_i=128, tile_j=128)    # 3x3 grid: resident row block,
                                                      # per-row-tile partials, padding
    check(64, 32, seed=3, use_bf16_matmul=True,       # bf16-MXU accuracy knob
          rtol=5e-2, atol=5e-3)

    print("KERNEL_OK")
</pallas_src>

<mosaic_0001>
module attributes {stable_mosaic.version = 11 : i64} {
  func.func @_row_stats_kernel(%arg0: i32, %arg1: memref<8x32xf32, #tpu.memory_space<vmem>>, %arg2: memref<8x32xf32, #tpu.memory_space<vmem>>, %arg3: memref<8x1xf32, #tpu.memory_space<vmem>>, %arg4: memref<8x1xf32, #tpu.memory_space<vmem>>, %arg5: memref<8x1xf32, #tpu.memory_space<vmem>>) attributes {dimension_semantics = [#tpu.dimension_semantics<parallel>], iteration_bounds = array<i64: 1>, scalar_prefetch = 0 : i64, scratch_operands = 0 : i64, tpu.core_type = #tpu.core_type<tc>, window_params = [{transform_indices = @transform_0, window_bounds = array<i64: 8, 32>}, {transform_indices = @transform_1, window_bounds = array<i64: 8, 32>}, {transform_indices = @transform_2, window_bounds = array<i64: 8, 1>}, {transform_indices = @transform_3, window_bounds = array<i64: 8, 1>}, {transform_indices = @transform_4, window_bounds = array<i64: 8, 1>}]} {
    %c0 = arith.constant 0 : index
    %c0_0 = arith.constant 0 : index
    %0 = vector.load %arg1[%c0, %c0_0] : memref<8x32xf32, #tpu.memory_space<vmem>>, vector<8x32xf32>
    %c0_1 = arith.constant 0 : index
    %c0_2 = arith.constant 0 : index
    %1 = vector.load %arg2[%c0_1, %c0_2] : memref<8x32xf32, #tpu.memory_space<vmem>>, vector<8x32xf32>
    %2 = arith.mulf %0, %0 : vector<8x32xf32>
    %cst = arith.constant dense<0.000000e+00> : vector<8xf32>
    %3 = vector.multi_reduction <add>, %2, %cst [1] : vector<8x32xf32> to vector<8xf32>
    %4 = vector.shape_cast %3 : vector<8xf32> to vector<8x1xf32>
    %5 = math.rsqrt %4 : vector<8x1xf32>
    %cst_3 = arith.constant 9.99999995E+11 : f32
    %6 = vector.broadcast %cst_3 : f32 to vector<8x1xf32>
    %7 = arith.minimumf %5, %6 : vector<8x1xf32>
    %8 = arith.mulf %1, %1 : vector<8x32xf32>
    %cst_4 = arith.constant dense<0.000000e+00> : vector<8xf32>
    %9 = vector.multi_reduction <add>, %8, %cst_4 [1] : vector<8x32xf32> to vector<8xf32>
    %10 = vector.shape_cast %9 : vector<8xf32> to vector<8x1xf32>
    %11 = math.rsqrt %10 : vector<8x1xf32>
    %cst_5 = arith.constant 9.99999995E+11 : f32
    %12 = vector.broadcast %cst_5 : f32 to vector<8x1xf32>
    %13 = arith.minimumf %11, %12 : vector<8x1xf32>
    %c0_6 = arith.constant 0 : index
    %c0_7 = arith.constant 0 : index
    %14 = vector.load %arg3[%c0_6, %c0_7] : memref<8x1xf32, #tpu.memory_space<vmem>>, vector<8x1xf32>
    tpu.vector_store %arg3[%c0_6, %c0_7], %7 {strides = array<i32>} : memref<8x1xf32, #tpu.memory_space<vmem>>, vector<8x1xf32>,
    %c0_8 = arith.constant 0 : index
    %c0_9 = arith.constant 0 : index
    %15 = vector.load %arg4[%c0_8, %c0_9] : memref<8x1xf32, #tpu.memory_space<vmem>>, vector<8x1xf32>
    tpu.vector_store %arg4[%c0_8, %c0_9], %13 {strides = array<i32>} : memref<8x1xf32, #tpu.memory_space<vmem>>, vector<8x1xf32>,
    %16 = arith.mulf %0, %1 : vector<8x32xf32>
    %cst_10 = arith.constant dense<0.000000e+00> : vector<8xf32>
    %17 = vector.multi_reduction <add>, %16, %cst_10 [1] : vector<8x32xf32> to vector<8xf32>
    %18 = vector.shape_cast %17 : vector<8xf32> to vector<8x1xf32>
    %19 = arith.mulf %18, %7 : vector<8x1xf32>
    %20 = arith.mulf %19, %13 : vector<8x1xf32>
    %c0_11 = arith.constant 0 : index
    %c0_12 = arith.constant 0 : index
    %21 = vector.load %arg5[%c0_11, %c0_12] : memref<8x1xf32, #tpu.memory_space<vmem>>, vector<8x1xf32>
    tpu.vector_store %arg5[%c0_11, %c0_12], %20 {strides = array<i32>} : memref<8x1xf32, #tpu.memory_space<vmem>>, vector<8x1xf32>,
    return
  }
  func.func @transform_0(%arg0: i32) -> (i32, i32) {
    %c0_i32 = arith.constant 0 : i32
    %c0_i32_0 = arith.constant 0 : i32
    return %arg0, %c0_i32 : i32, i32
  }
  func.func @transform_1(%arg0: i32) -> (i32, i32) {
    %c0_i32 = arith.constant 0 : i32
    %c0_i32_0 = arith.constant 0 : i32
    return %arg0, %c0_i32 : i32, i32
  }
  func.func @transform_2(%arg0: i32) -> (i32, i32) {
    %c0_i32 = arith.constant 0 : i32
    %c0_i32_0 = arith.constant 0 : i32
    return %arg0, %c0_i32 : i32, i32
  }
  func.func @transform_3(%arg0: i32) -> (i32, i32) {
    %c0_i32 = arith.constant 0 : i32
    %c0_i32_0 = arith.constant 0 : i32
    return %arg0, %c0_i32 : i32, i32
  }
  func.func @transform_4(%arg0: i32) -> (i32, i32) {
    %c0_i32 = arith.constant 0 : i32
    %c0_i32_0 = arith.constant 0 : i32
    return %arg0, %c0_i32 : i32, i32
  }
}

</mosaic_0001>

<llo_original>
// kernel: tpu_custom_call.1
$region0: #{tpu_custom_call.1}
  #allocation0 [shape = 'u32[]', space=smem, size = 0x4, offset = 0x4, fixed_abs, tag = 'smem constant byte address 0x4 - core index']
  #allocation1 [shape = 'u32[144,128]{1,0:T(1,128)}', space=vmem, size = 0x12000, scoped, tag = 'internal scratch']
  %s0 = inlined_call_operand.hbm [shape: f32[8,32], index: 0, kind: input, shape index: {}]
  %s1 = inlined_call_operand.hbm [shape: f32[8,32], index: 1, kind: input, shape index: {}]
  %s2 = inlined_call_operand.vmem [shape: f32[8,1], index: 2, kind: output, shape index: {0}]
  %s3 = inlined_call_operand.vmem [shape: f32[8,1], index: 3, kind: output, shape index: {1}]
  %s4 = inlined_call_operand.vmem [shape: f32[8,1], index: 4, kind: output, shape index: {2}]
  %5 = xla_tuple %s2, %s3, %s4
  %s6 = sld [smem:[#allocation0]]
  $region42: #{tpu_custom_call.1} parent=0
    _
  %s8 = ssub.s32 1, %s6
  %s9 = scalar_select 0, %s8, %s6
  $region1: #{tpu_custom_call.1} parent=0
    #allocation2 [shape = 'u8[4096]{0}', space=vmem, size = 0x1000, scoped, tag = 'input window, operand 0, single buffered']
    #allocation3 [shape = 's32[1]{0}', space=sflag, size = 0x4, scoped, tag = 'scoped memory for tpu_custom_call.1']
    #allocation4 [shape = 'u8[4096]{0}', space=vmem, size = 0x1000, scoped, tag = 'input window, operand 1, single buffered']
    #allocation5 [shape = 's32[1]{0}', space=sflag, size = 0x4, scoped, tag = 'scoped memory for tpu_custom_call.1']
    %10 = vsyncpa [#allocation3], 0
    %11 = vsyncpa [#allocation5], 0
    // Predicated region
    $region2: #{tpu_custom_call.1} parent=1 // pred_check
      _
    $region3: #{tpu_custom_call.1} parent=1 // pred_check_branch
      %13 = sbr.rel (0) target = $region5
    $region4: #{tpu_custom_call.1} parent=1 // pred_region
      %s15 = ssub.s32 128, 128
      %16 = vsyncadd [#allocation3], %s15
      %s18 = sshll.u32 [#allocation2], 4
      %s19 = int_to_ptr.vmem [resolvable:$true] %s18
      %21 = dma.hbm_to_vmem [thread:$0]  %s0, 128, %s19, [#allocation3]
    $region5: #{tpu_custom_call.1} parent=1 // pred_fallthru
      _
    // Predicated region
    $region6: #{tpu_custom_call.1} parent=1 // pred_check
      _
    $region7: #{tpu_custom_call.1} parent=1 // pred_check_branch
      %23 = sbr.rel (0) target = $region9
    $region8: #{tpu_custom_call.1} parent=1 // pred_region
      %s25 = ssub.s32 128, 128
      %26 = vsyncadd [#allocation5], %s25
      %s28 = sshll.u32 [#allocation4], 4
      %s29 = int_to_ptr.vmem [resolvable:$true] %s28
      %31 = dma.hbm_to_vmem [thread:$0]  %s1, 128, %s29, [#allocation5]
    $region9: #{tpu_custom_call.1} parent=1 // pred_fallthru
      _
    // Predicated region
    $region10: #{tpu_custom_call.1} parent=1 // pred_check
      _
    $region11: #{tpu_custom_call.1} parent=1 // pred_check_branch
      %33 = sbr.rel (0) target = $region13
    $region12: #{tpu_custom_call.1} parent=1 // pred_region
      %34 = dma.done [#allocation3], 128
    $region13: #{tpu_custom_call.1} parent=1 // pred_fallthru
      _
    // Predicated region
    $region14: #{tpu_custom_call.1} parent=1 // pred_check
      _
    $region15: #{tpu_custom_call.1} parent=1 // pred_check_branch
      %36 = sbr.rel (0) target = $region17
    $region16: #{tpu_custom_call.1} parent=1 // pred_region
      %37 = dma.done [#allocation5], 128
    $region17: #{tpu_custom_call.1} parent=1 // pred_fallthru
      _
    %v38 = vld [vmem:[#allocation2] sm:$0xff]
    %v39 = vld [vmem:[#allocation4] sm:$0xff]
    %v40 = vmul.f32 %v38, %v38
    %vm41 = vcmask 261120
    %v42 = vsel %vm41, %v40, 0.0
    %43 = vadd.xlane.f32.xlu0 %v42
    %v44 = vpop.xlane.xlu0 %43
    %v45 = vrsqrt.pop %v44
    %v46 = vmin.f32 %v45, 1e+12
    %v47 = vmul.f32 %v39, %v39
    %v48 = vsel %vm41, %v47, 0.0
    %49 = vadd.xlane.f32.xlu0 %v48
    %v50 = vpop.xlane.xlu0 %49
    %v51 = vrsqrt.pop %v50
    %v52 = vmin.f32 %v51, 1e+12
    %vm53 = vcmask 7168
    %54 = vst.msk [vmem:[%s2] sm:$0xff] %vm53, %v46
    %55 = vst.msk [vmem:[%s3] sm:$0xff] %vm53, %v52
    %v56 = vmul.f32 %v38, %v39
    %v57 = vsel %vm41, %v56, 0.0
    %58 = vadd.xlane.f32.xlu0 %v57
    %v59 = vpop.xlane.xlu0 %58
    %v60 = vmul.f32 %v59, %v46
    %v61 = vmul.f32 %v60, %v52
    %62 = vst.msk [vmem:[%s4] sm:$0xff] %vm53, %v61
    // Predicated region
    $region18: #{tpu_custom_call.1} parent=1 // pred_check
      _
    $region19: #{tpu_custom_call.1} parent=1 // pred_check_branch
      %64 = sbr.rel (0) target = $region21
    $region20: #{tpu_custom_call.1} parent=1 // pred_region
      _
    $region21: #{tpu_custom_call.1} parent=1 // pred_fallthru
      _
    // Predicated region
    $region22: #{tpu_custom_call.1} parent=1 // pred_check
      _
    $region23: #{tpu_custom_call.1} parent=1 // pred_check_branch
      %66 = sbr.rel (0) target = $region25
    $region24: #{tpu_custom_call.1} parent=1 // pred_region
      _
    $region25: #{tpu_custom_call.1} parent=1 // pred_fallthru
      _
    // Predicated region
    $region26: #{tpu_custom_call.1} parent=1 // pred_check
      _
    $region27: #{tpu_custom_call.1} parent=1 // pred_check_branch
      %68 = sbr.rel (0) target = $region29
    $region28: #{tpu_custom_call.1} parent=1 // pred_region
      _
    $region29: #{tpu_custom_call.1} parent=1 // pred_fallthru
      _
    // Predicated region
    $region30: #{tpu_custom_call.1} parent=1 // pred_check
      _
    $region31: #{tpu_custom_call.1} parent=1 // pred_check_branch
      %70 = sbr.rel (0) target = $region33
    $region32: #{tpu_custom_call.1} parent=1 // pred_region
      _
    $region33: #{tpu_custom_call.1} parent=1 // pred_fallthru
      _
    // Predicated region
    $region34: #{tpu_custom_call.1} parent=1 // pred_check
      _
    $region35: #{tpu_custom_call.1} parent=1 // pred_check_branch
      %72 = sbr.rel (0) target = $region37
    $region36: #{tpu_custom_call.1} parent=1 // pred_region
      _
    $region37: #{tpu_custom_call.1} parent=1 // pred_fallthru
      _
    // Predicated region
    $region38: #{tpu_custom_call.1} parent=1 // pred_check
      _
    $region39: #{tpu_custom_call.1} parent=1 // pred_check_branch
      %74 = sbr.rel (0) target = $region41
    $region40: #{tpu_custom_call.1} parent=1 // pred_region
      _
    $region41: #{tpu_custom_call.1} parent=1 // pred_fallthru
      _
    %75 = vsyncpa [#allocation3], 1
    %76 = vsyncpa [#allocation5], 1

</llo_original>
